<compile_context>
chip_gen: v6e
topology: v6e:2x2x1
jax: 0.10.0
libtpu: 0.0.40
codegen_flags: <defaults>
</compile_context>

<pallas_src>
import jax
import jax.numpy as jnp
from jax.experimental import pallas as pl
from jax.experimental.pallas import tpu as pltpu

_MIB = 1024 * 1024
# f32 output-tile budget per grid step.  Double-buffered (u8 in + f32 out)
# tiles => ~15 MiB resident, covered explicitly by vmem_limit_bytes below.
_TARGET_OUT_TILE_BYTES = 6 * _MIB


def _normalize_kernel(x_ref, o_ref):
    # x_ref: (tR, L) uint8 tile, o_ref: (tR, L) float32 tile.
    # Multiply by 1/255 instead of dividing: a single VPU vmul per vreg keeps
    # the kernel purely DMA-bound (an f32 divide issues an EUP reciprocal +
    # Newton VALU sequence per vreg).  Differs from np.float32(x)/255.0 by at
    # most ~1 ULP on a few of the 256 input codes.
    o_ref[...] = x_ref[...].astype(jnp.float32) * jnp.float32(1.0 / 255.0)


def _flat_lane_view(n):
    """Largest lane width in {32768..128} that exactly factors n, or None."""
    for lanes in (32768, 16384, 8192, 4096, 2048, 1024, 512, 256, 128):
        if n % lanes == 0:
            return n // lanes, lanes
    return None


def _tile_rows(rows, lanes):
    budget = _TARGET_OUT_TILE_BYTES // (4 * lanes)
    # Multiple of 32 rows: aligned for both the packed uint8 (32, 128) and the
    # f32 (8, 128) native tiles.
    budget = max(32, (budget // 32) * 32)
    return rows if rows <= budget else budget


def processor_forward(img_hwc):
    """Processor.forward: (H, W, C) uint8 image -> (1, C, H, W) float32 / 255."""
    H, W, C = img_hwc.shape
    n = H * W * C

    # HWC -> CHW as a uint8 layout op (4x cheaper than transposing float32);
    # allow_input_fusion below lets XLA fold this producer into the kernel
    # input when it decides that is legal/profitable.
    img_chw_u8 = jnp.transpose(img_hwc, (2, 0, 1))

    flat = _flat_lane_view(n)
    if flat is not None:
        rows, lanes = flat          # lane-dense view, independent of W
    else:
        rows, lanes = C * H, W      # fallback: W is the (full-dim) lane axis
    x2d = img_chw_u8.reshape(rows, lanes)   # free: contiguous row-major view

    t_rows = _tile_rows(rows, lanes)
    grid = (pl.cdiv(rows, t_rows),)

    out_tile_bytes = t_rows * lanes * 4
    in_tile_bytes = t_rows * lanes
    vmem_limit = int(min(max(32 * _MIB, 2 * (out_tile_bytes + in_tile_bytes) + 8 * _MIB),
                         62 * _MIB))

    spec = pl.BlockSpec((t_rows, lanes), lambda i: (i, 0))
    out2d = pl.pallas_call(
        _normalize_kernel,
        out_shape=jax.ShapeDtypeStruct((rows, lanes), jnp.float32),
        grid=grid,
        in_specs=[spec],
        out_specs=spec,
        compiler_params=pltpu.CompilerParams(
            dimension_semantics=("parallel",),
            vmem_limit_bytes=vmem_limit,
            # Opportunistic: lets XLA fuse the uint8 transpose/reshape producer
            # into the kernel input instead of materializing it in HBM.
            allow_input_fusion=[True],
        ),
        # Advisory: 1 B read + 4 B written per element, ~1 flop/elem, no
        # transcendentals -> lets XLA schedule this mem-bound call sensibly.
        cost_estimate=pl.CostEstimate(flops=n, transcendentals=0,
                                      bytes_accessed=5 * n),
    )(x2d)

    # (rows, lanes) -> (C, H, W) is a free row-major reshape; np.expand_dims /
    # np.ascontiguousarray are layout no-ops in JAX.
    return out2d.reshape(C, H, W)[None, ...]


if __name__ == "__main__":
    key = jax.random.PRNGKey(0)
    H, W, C = 64, 128, 3  # small RGB-like HWC image

    img = jax.random.randint(key, (H, W, C), 0, 256, dtype=jnp.int32).astype(jnp.uint8)

    fwd = jax.jit(processor_forward)
    out = jax.block_until_ready(fwd(img))

    # Pure-JAX reference of the numpy semantics.
    ref = jnp.transpose(img.astype(jnp.float32) / 255.0, (2, 0, 1))[None, ...]
    assert out.shape == (1, C, H, W), out.shape
    assert out.dtype == jnp.float32, out.dtype
    assert jnp.allclose(out, ref), "mismatch vs reference"

    print("KERNEL_OK")
</pallas_src>

<mosaic_0001>
module attributes {stable_mosaic.version = 11 : i64} {
  func.func @_normalize_kernel(%arg0: i32, %arg1: memref<3x8192xi8, #tpu.memory_space<vmem>>, %arg2: memref<3x8192xf32, #tpu.memory_space<vmem>>) attributes {dimension_semantics = [#tpu.dimension_semantics<parallel>], iteration_bounds = array<i64: 1>, scalar_prefetch = 0 : i64, scratch_operands = 0 : i64, tpu.core_type = #tpu.core_type<tc>, window_params = [{transform_indices = @transform_0, window_bounds = array<i64: 3, 8192>}, {transform_indices = @transform_1, window_bounds = array<i64: 3, 8192>}]} {
    %c0 = arith.constant 0 : index
    %c0_0 = arith.constant 0 : index
    %0 = vector.load %arg1[%c0, %c0_0] : memref<3x8192xi8, #tpu.memory_space<vmem>>, vector<3x8192xi8>
    %1 = arith.uitofp %0 : vector<3x8192xi8> to vector<3x8192xf32>
    %cst = arith.constant 0.00392156886 : f32
    %2 = vector.broadcast %cst : f32 to vector<3x8192xf32>
    %3 = arith.mulf %1, %2 : vector<3x8192xf32>
    %c0_1 = arith.constant 0 : index
    %c0_2 = arith.constant 0 : index
    %4 = vector.load %arg2[%c0_1, %c0_2] : memref<3x8192xf32, #tpu.memory_space<vmem>>, vector<3x8192xf32>
    tpu.vector_store %arg2[%c0_1, %c0_2], %3 {strides = array<i32>} : memref<3x8192xf32, #tpu.memory_space<vmem>>, vector<3x8192xf32>,
    return
  }
  func.func @transform_0(%arg0: i32) -> (i32, i32) {
    %c0_i32 = arith.constant 0 : i32
    %c0_i32_0 = arith.constant 0 : i32
    return %arg0, %c0_i32 : i32, i32
  }
  func.func @transform_1(%arg0: i32) -> (i32, i32) {
    %c0_i32 = arith.constant 0 : i32
    %c0_i32_0 = arith.constant 0 : i32
    return %arg0, %c0_i32 : i32, i32
  }
}

</mosaic_0001>

<llo_original>
// kernel: processor_forward.2
$region0: #{processor_forward.2}
  #allocation0 [shape = 'u32[]', space=smem, size = 0x4, offset = 0x4, fixed_abs, tag = 'smem constant byte address 0x4 - core index']
  #allocation1 [shape = 'u32[144,128]{1,0:T(1,128)}', space=vmem, size = 0x12000, scoped, tag = 'internal scratch']
  %s0 = inlined_call_operand.vmem [shape: u8[1,3,64,128], index: 0, kind: input, shape index: {}]
  %s1 = inlined_call_operand.vmem [shape: f32[3,8192], index: 1, kind: output, shape index: {}]
  %s2 = sld [smem:[#allocation0]]
  $region14: #{processor_forward.2} parent=0
    _
  %s4 = ssub.s32 1, %s2
  %s5 = scalar_select 0, %s4, %s2
  $region1: #{processor_forward.2} parent=0
    #allocation2 [shape = 'u8[32768]{0}', space=vmem, size = 0x8000, dematerialized = true, scoped, tag = 'FusionAdapter Buffer %fusion.1 = u8[3,8192]{1,0:T(4,128)(4,1)} fusion(%param_0.1), kind=kLoop, calls=%fused_computation.1.clone, metadata={op_name="jit(processor_forward)/reshape" stack_frame_id=8}']
    // Predicated region
    $region2: #{processor_forward.2} parent=1 // pred_check
      _
    $region3: #{processor_forward.2} parent=1 // pred_check_branch
      %7 = sbr.rel (0) target = $region5
    $region4: #{processor_forward.2} parent=1 // pred_region
      _
    $region5: #{processor_forward.2} parent=1 // pred_fallthru
      _
    %v8 = vld [vmem:[%s0] ss:$0 sm:$0x1]
    %v9 = vunpack.c.0.s8 %v8
    %v10 = vunpack.c.1.s8 %v8
    %v11 = vunpack.c.2.s8 %v8
    %v12 = vunpack.c.3.s8 %v8
    %v13 = vand.u32 %v9, 255
    %v14 = vand.u32 %v10, 255
    %v15 = vand.u32 %v11, 255
    %v16 = vand.u32 %v12, 255
    %s18 = ssub.s32 2, 1
    %v19 = vpack.c.b16 0, %v13
    %v20 = vpack.c.b8 0, %v19
    %21 = vst [vmem:[#allocation2] sm:%s18] %v20
    %s22 = scalar_lea.vmem %s0, 1
    %v23 = vld [vmem:[%s22] ss:$0 sm:$0x1]
    %v24 = vunpack.c.0.s8 %v23
    %v25 = vunpack.c.1.s8 %v23
    %v26 = vunpack.c.2.s8 %v23
    %v27 = vunpack.c.3.s8 %v23
    %v28 = vand.u32 %v24, 255
    %v29 = vand.u32 %v25, 255
    %v30 = vand.u32 %v26, 255
    %v31 = vand.u32 %v27, 255
    %s32 = scalar_lea.vmem [#allocation2], 1
    %s34 = ssub.s32 2, 1
    %v35 = vpack.c.b16 0, %v28
    %v36 = vpack.c.b8 0, %v35
    %37 = vst [vmem:[%s32] sm:%s34] %v36
    %s38 = scalar_lea.vmem %s0, 2
    %v39 = vld [vmem:[%s38] ss:$0 sm:$0x1]
    %v40 = vunpack.c.0.s8 %v39
    %v41 = vunpack.c.1.s8 %v39
    %v42 = vunpack.c.2.s8 %v39
    %v43 = vunpack.c.3.s8 %v39
    %v44 = vand.u32 %v40, 255
    %v45 = vand.u32 %v41, 255
    %v46 = vand.u32 %v42, 255
    %v47 = vand.u32 %v43, 255
    %s48 = scalar_lea.vmem [#allocation2], 2
    %s50 = ssub.s32 2, 1
    %v51 = vpack.c.b16 0, %v44
    %v52 = vpack.c.b8 0, %v51
    %53 = vst [vmem:[%s48] sm:%s50] %v52
    %s54 = scalar_lea.vmem %s0, 3
    %v55 = vld [vmem:[%s54] ss:$0 sm:$0x1]
    %v56 = vunpack.c.0.s8 %v55
    %v57 = vunpack.c.1.s8 %v55
    %v58 = vunpack.c.2.s8 %v55
    %v59 = vunpack.c.3.s8 %v55
    %v60 = vand.u32 %v56, 255
    %v61 = vand.u32 %v57, 255
    %v62 = vand.u32 %v58, 255
    %v63 = vand.u32 %v59, 255
    %s64 = scalar_lea.vmem [#allocation2], 3
    %s66 = ssub.s32 2, 1
    %v67 = vpack.c.b16 0, %v60
    %v68 = vpack.c.b8 0, %v67
    %69 = vst [vmem:[%s64] sm:%s66] %v68
    %s70 = scalar_lea.vmem %s0, 4
    %v71 = vld [vmem:[%s70] ss:$0 sm:$0x1]
    %v72 = vunpack.c.0.s8 %v71
    %v73 = vunpack.c.1.s8 %v71
    %v74 = vunpack.c.2.s8 %v71
    %v75 = vunpack.c.3.s8 %v71
    %v76 = vand.u32 %v72, 255
    %v77 = vand.u32 %v73, 255
    %v78 = vand.u32 %v74, 255
    %v79 = vand.u32 %v75, 255
    %s80 = scalar_lea.vmem [#allocation2], 4
    %s82 = ssub.s32 2, 1
    %v83 = vpack.c.b16 0, %v76
    %v84 = vpack.c.b8 0, %v83
    %85 = vst [vmem:[%s80] sm:%s82] %v84
    %s86 = scalar_lea.vmem %s0, 5
    %v87 = vld [vmem:[%s86] ss:$0 sm:$0x1]
    %v88 = vunpack.c.0.s8 %v87
    %v89 = vunpack.c.1.s8 %v87
    %v90 = vunpack.c.2.s8 %v87
    %v91 = vunpack.c.3.s8 %v87
    %v92 = vand.u32 %v88, 255
    %v93 = vand.u32 %v89, 255
    %v94 = vand.u32 %v90, 255
    %v95 = vand.u32 %v91, 255
    %s96 = scalar_lea.vmem [#allocation2], 5
    %s98 = ssub.s32 2, 1
    %v99 = vpack.c.b16 0, %v92
    %v100 = vpack.c.b8 0, %v99
    %101 = vst [vmem:[%s96] sm:%s98] %v100
    %s102 = scalar_lea.vmem %s0, 6
    %v103 = vld [vmem:[%s102] ss:$0 sm:$0x1]
    %v104 = vunpack.c.0.s8 %v103
    %v105 = vunpack.c.1.s8 %v103
    %v106 = vunpack.c.2.s8 %v103
    %v107 = vunpack.c.3.s8 %v103
    %v108 = vand.u32 %v104, 255
    %v109 = vand.u32 %v105, 255
    %v110 = vand.u32 %v106, 255
    %v111 = vand.u32 %v107, 255
    %s112 = scalar_lea.vmem [#allocation2], 6
    %s114 = ssub.s32 2, 1
    %v115 = vpack.c.b16 0, %v108
    %v116 = vpack.c.b8 0, %v115
    %117 = vst [vmem:[%s112] sm:%s114] %v116
    %s118 = scalar_lea.vmem %s0, 7
    %v119 = vld [vmem:[%s118] ss:$0 sm:$0x1]
    %v120 = vunpack.c.0.s8 %v119
    %v121 = vunpack.c.1.s8 %v119
    %v122 = vunpack.c.2.s8 %v119
    %v123 = vunpack.c.3.s8 %v119
    %v124 = vand.u32 %v120, 255
    %v125 = vand.u32 %v121, 255
    %v126 = vand.u32 %v122, 255
    %v127 = vand.u32 %v123, 255
    %s128 = scalar_lea.vmem [#allocation2], 7
    %s130 = ssub.s32 2, 1
    %v131 = vpack.c.b16 0, %v124
    %v132 = vpack.c.b8 0, %v131
    %133 = vst [vmem:[%s128] sm:%s130] %v132
    %s134 = scalar_lea.vmem %s0, 8
    %v135 = vld [vmem:[%s134] ss:$0 sm:$0x1]
    %v136 = vunpack.c.0.s8 %v135
    %v137 = vunpack.c.1.s8 %v135
    %v138 = vunpack.c.2.s8 %v135
    %v139 = vunpack.c.3.s8 %v135
    %v140 = vand.u32 %v136, 255
    %v141 = vand.u32 %v137, 255
    %v142 = vand.u32 %v138, 255
    %v143 = vand.u32 %v139, 255
    %s144 = scalar_lea.vmem [#allocation2], 8
    %s146 = ssub.s32 2, 1
    %v147 = vpack.c.b16 0, %v140
    %v148 = vpack.c.b8 0, %v147
    %149 = vst [vmem:[%s144] sm:%s146] %v148
    %s150 = scalar_lea.vmem %s0, 9
    %v151 = vld [vmem:[%s150] ss:$0 sm:$0x1]
    %v152 = vunpack.c.0.s8 %v151
    %v153 = vunpack.c.1.s8 %v151
    %v154 = vunpack.c.2.s8 %v151
    %v155 = vunpack.c.3.s8 %v151
    %v156 = vand.u32 %v152, 255
    %v157 = vand.u32 %v153, 255
    %v158 = vand.u32 %v154, 255
    %v159 = vand.u32 %v155, 255
    %s160 = scalar_lea.vmem [#allocation2], 9
    %s162 = ssub.s32 2, 1
    %v163 = vpack.c.b16 0, %v156
    %v164 = vpack.c.b8 0, %v163
    %165 = vst [vmem:[%s160] sm:%s162] %v164
    %s166 = scalar_lea.vmem %s0, 10
    %v167 = vld [vmem:[%s166] ss:$0 sm:$0x1]
    %v168 = vunpack.c.0.s8 %v167
    %v169 = vunpack.c.1.s8 %v167
    %v170 = vunpack.c.2.s8 %v167
    %v171 = vunpack.c.3.s8 %v167
    %v172 = vand.u32 %v168, 255
    %v173 = vand.u32 %v169, 255
    %v174 = vand.u32 %v170, 255
    %v175 = vand.u32 %v171, 255
    %s176 = scalar_lea.vmem [#allocation2], 10
    %s178 = ssub.s32 2, 1
    %v179 = vpack.c.b16 0, %v172
    %v180 = vpack.c.b8 0, %v179
    %181 = vst [vmem:[%s176] sm:%s178] %v180
    %s182 = scalar_lea.vmem %s0, 11
    %v183 = vld [vmem:[%s182] ss:$0 sm:$0x1]
    %v184 = vunpack.c.0.s8 %v183
    %v185 = vunpack.c.1.s8 %v183
    %v186 = vunpack.c.2.s8 %v183
    %v187 = vunpack.c.3.s8 %v183
    %v188 = vand.u32 %v184, 255
    %v189 = vand.u32 %v185, 255
    %v190 = vand.u32 %v186, 255
    %v191 = vand.u32 %v187, 255
    %s192 = scalar_lea.vmem [#allocation2], 11
    %s194 = ssub.s32 2, 1
    %v195 = vpack.c.b16 0, %v188
    %v196 = vpack.c.b8 0, %v195
    %197 = vst [vmem:[%s192] sm:%s194] %v196
    %s198 = scalar_lea.vmem %s0, 12
    %v199 = vld [vmem:[%s198] ss:$0 sm:$0x1]
    %v200 = vunpack.c.0.s8 %v199
    %v201 = vunpack.c.1.s8 %v199
    %v202 = vunpack.c.2.s8 %v199
    %v203 = vunpack.c.3.s8 %v199
    %v204 = vand.u32 %v200, 255
    %v205 = vand.u32 %v201, 255
    %v206 = vand.u32 %v202, 255
    %v207 = vand.u32 %v203, 255
    %s208 = scalar_lea.vmem [#allocation2], 12
    %s210 = ssub.s32 2, 1
    %v211 = vpack.c.b16 0, %v204
    %v212 = vpack.c.b8 0, %v211
    %213 = vst [vmem:[%s208] sm:%s210] %v212
    %s214 = scalar_lea.vmem %s0, 13
    %v215 = vld [vmem:[%s214] ss:$0 sm:$0x1]
    %v216 = vunpack.c.0.s8 %v215
    %v217 = vunpack.c.1.s8 %v215
    %v218 = vunpack.c.2.s8 %v215
    %v219 = vunpack.c.3.s8 %v215
    %v220 = vand.u32 %v216, 255
    %v221 = vand.u32 %v217, 255
    %v222 = vand.u32 %v218, 255
    %v223 = vand.u32 %v219, 255
    %s224 = scalar_lea.vmem [#allocation2], 13
    %s226 = ssub.s32 2, 1
    %v227 = vpack.c.b16 0, %v220
    %v228 = vpack.c.b8 0, %v227
    %229 = vst [vmem:[%s224] sm:%s226] %v228
    %s230 = scalar_lea.vmem %s0, 14
    %v231 = vld [vmem:[%s230] ss:$0 sm:$0x1]
    %v232 = vunpack.c.0.s8 %v231
    %v233 = vunpack.c.1.s8 %v231
    %v234 = vunpack.c.2.s8 %v231
    %v235 = vunpack.c.3.s8 %v231
    %v236 = vand.u32 %v232, 255
    %v237 = vand.u32 %v233, 255
    %v238 = vand.u32 %v234, 255
    %v239 = vand.u32 %v235, 255
    %s240 = scalar_lea.vmem [#allocation2], 14
    %s242 = ssub.s32 2, 1
    %v243 = vpack.c.b16 0, %v236
    %v244 = vpack.c.b8 0, %v243
    %245 = vst [vmem:[%s240] sm:%s242] %v244
    %s246 = scalar_lea.vmem %s0, 15
    %v247 = vld [vmem:[%s246] ss:$0 sm:$0x1]
    %v248 = vunpack.c.0.s8 %v247
    %v249 = vunpack.c.1.s8 %v247
    %v250 = vunpack.c.2.s8 %v247
    %v251 = vunpack.c.3.s8 %v247
    %v252 = vand.u32 %v248, 255
    %v253 = vand.u32 %v249, 255
    %v254 = vand.u32 %v250, 255
    %v255 = vand.u32 %v251, 255
    %s256 = scalar_lea.vmem [#allocation2], 15
    %s258 = ssub.s32 2, 1
    %v259 = vpack.c.b16 0, %v252
    %v260 = vpack.c.b8 0, %v259
    %261 = vst [vmem:[%s256] sm:%s258] %v260
    %s262 = scalar_lea.vmem %s0, 16
    %v263 = vld [vmem:[%s262] ss:$0 sm:$0x1]
    %v264 = vunpack.c.0.s8 %v263
    %v265 = vunpack.c.1.s8 %v263
    %v266 = vunpack.c.2.s8 %v263
    %v267 = vunpack.c.3.s8 %v263
    %v268 = vand.u32 %v264, 255
    %v269 = vand.u32 %v265, 255
    %v270 = vand.u32 %v266, 255
    %v271 = vand.u32 %v267, 255
    %s272 = scalar_lea.vmem [#allocation2], 16
    %s274 = ssub.s32 2, 1
    %v275 = vpack.c.b16 0, %v268
    %v276 = vpack.c.b8 0, %v275
    %277 = vst [vmem:[%s272] sm:%s274] %v276
    %s278 = scalar_lea.vmem %s0, 17
    %v279 = vld [vmem:[%s278] ss:$0 sm:$0x1]
    %v280 = vunpack.c.0.s8 %v279
    %v281 = vunpack.c.1.s8 %v279
    %v282 = vunpack.c.2.s8 %v279
    %v283 = vunpack.c.3.s8 %v279
    %v284 = vand.u32 %v280, 255
    %v285 = vand.u32 %v281, 255
    %v286 = vand.u32 %v282, 255
    %v287 = vand.u32 %v283, 255
    %s288 = scalar_lea.vmem [#allocation2], 17
    %s290 = ssub.s32 2, 1
    %v291 = vpack.c.b16 0, %v284
    %v292 = vpack.c.b8 0, %v291
    %293 = vst [vmem:[%s288] sm:%s290] %v292
    %s294 = scalar_lea.vmem %s0, 18
    %v295 = vld [vmem:[%s294] ss:$0 sm:$0x1]
    %v296 = vunpack.c.0.s8 %v295
    %v297 = vunpack.c.1.s8 %v295
    %v298 = vunpack.c.2.s8 %v295
    %v299 = vunpack.c.3.s8 %v295
    %v300 = vand.u32 %v296, 255
    %v301 = vand.u32 %v297, 255
    %v302 = vand.u32 %v298, 255
    %v303 = vand.u32 %v299, 255
    %s304 = scalar_lea.vmem [#allocation2], 18
    %s306 = ssub.s32 2, 1
    %v307 = vpack.c.b16 0, %v300
    %v308 = vpack.c.b8 0, %v307
    %309 = vst [vmem:[%s304] sm:%s306] %v308
    %s310 = scalar_lea.vmem %s0, 19
    %v311 = vld [vmem:[%s310] ss:$0 sm:$0x1]
    %v312 = vunpack.c.0.s8 %v311
    %v313 = vunpack.c.1.s8 %v311
    %v314 = vunpack.c.2.s8 %v311
    %v315 = vunpack.c.3.s8 %v311
    %v316 = vand.u32 %v312, 255
    %v317 = vand.u32 %v313, 255
    %v318 = vand.u32 %v314, 255
    %v319 = vand.u32 %v315, 255
    %s320 = scalar_lea.vmem [#allocation2], 19
    %s322 = ssub.s32 2, 1
    %v323 = vpack.c.b16 0, %v316
    %v324 = vpack.c.b8 0, %v323
    %325 = vst [vmem:[%s320] sm:%s322] %v324
    %s326 = scalar_lea.vmem %s0, 20
    %v327 = vld [vmem:[%s326] ss:$0 sm:$0x1]
    %v328 = vunpack.c.0.s8 %v327
    %v329 = vunpack.c.1.s8 %v327
    %v330 = vunpack.c.2.s8 %v327
    %v331 = vunpack.c.3.s8 %v327
    %v332 = vand.u32 %v328, 255
    %v333 = vand.u32 %v329, 255
    %v334 = vand.u32 %v330, 255
    %v335 = vand.u32 %v331, 255
    %s336 = scalar_lea.vmem [#allocation2], 20
    %s338 = ssub.s32 2, 1
    %v339 = vpack.c.b16 0, %v332
    %v340 = vpack.c.b8 0, %v339
    %341 = vst [vmem:[%s336] sm:%s338] %v340
    %s342 = scalar_lea.vmem %s0, 21
    %v343 = vld [vmem:[%s342] ss:$0 sm:$0x1]
    %v344 = vunpack.c.0.s8 %v343
    %v345 = vunpack.c.1.s8 %v343
    %v346 = vunpack.c.2.s8 %v343
    %v347 = vunpack.c.3.s8 %v343
    %v348 = vand.u32 %v344, 255
    %v349 = vand.u32 %v345, 255
    %v350 = vand.u32 %v346, 255
    %v351 = vand.u32 %v347, 255
    %s352 = scalar_lea.vmem [#allocation2], 21
    %s354 = ssub.s32 2, 1
    %v355 = vpack.c.b16 0, %v348
    %v356 = vpack.c.b8 0, %v355
    %357 = vst [vmem:[%s352] sm:%s354] %v356
    %s358 = scalar_lea.vmem %s0, 22
    %v359 = vld [vmem:[%s358] ss:$0 sm:$0x1]
    %v360 = vunpack.c.0.s8 %v359
    %v361 = vunpack.c.1.s8 %v359
    %v362 = vunpack.c.2.s8 %v359
    %v363 = vunpack.c.3.s8 %v359
    %v364 = vand.u32 %v360, 255
    %v365 = vand.u32 %v361, 255
    %v366 = vand.u32 %v362, 255
    %v367 = vand.u32 %v363, 255
    %s368 = scalar_lea.vmem [#allocation2], 22
    %s370 = ssub.s32 2, 1
    %v371 = vpack.c.b16 0, %v364
    %v372 = vpack.c.b8 0, %v371
    %373 = vst [vmem:[%s368] sm:%s370] %v372
    %s374 = scalar_lea.vmem %s0, 23
    %v375 = vld [vmem:[%s374] ss:$0 sm:$0x1]
    %v376 = vunpack.c.0.s8 %v375
    %v377 = vunpack.c.1.s8 %v375
    %v378 = vunpack.c.2.s8 %v375
    %v379 = vunpack.c.3.s8 %v375
    %v380 = vand.u32 %v376, 255
    %v381 = vand.u32 %v377, 255
    %v382 = vand.u32 %v378, 255
    %v383 = vand.u32 %v379, 255
    %s384 = scalar_lea.vmem [#allocation2], 23
    %s386 = ssub.s32 2, 1
    %v387 = vpack.c.b16 0, %v380
    %v388 = vpack.c.b8 0, %v387
    %389 = vst [vmem:[%s384] sm:%s386] %v388
    %s390 = scalar_lea.vmem %s0, 24
    %v391 = vld [vmem:[%s390] ss:$0 sm:$0x1]
    %v392 = vunpack.c.0.s8 %v391
    %v393 = vunpack.c.1.s8 %v391
    %v394 = vunpack.c.2.s8 %v391
    %v395 = vunpack.c.3.s8 %v391
    %v396 = vand.u32 %v392, 255
    %v397 = vand.u32 %v393, 255
    %v398 = vand.u32 %v394, 255
    %v399 = vand.u32 %v395, 255
    %s400 = scalar_lea.vmem [#allocation2], 24
    %s402 = ssub.s32 2, 1
    %v403 = vpack.c.b16 0, %v396
    %v404 = vpack.c.b8 0, %v403
    %405 = vst [vmem:[%s400] sm:%s402] %v404
    %s406 = scalar_lea.vmem %s0, 25
    %v407 = vld [vmem:[%s406] ss:$0 sm:$0x1]
    %v408 = vunpack.c.0.s8 %v407
    %v409 = vunpack.c.1.s8 %v407
    %v410 = vunpack.c.2.s8 %v407
    %v411 = vunpack.c.3.s8 %v407
    %v412 = vand.u32 %v408, 255
    %v413 = vand.u32 %v409, 255
    %v414 = vand.u32 %v410, 255
    %v415 = vand.u32 %v411, 255
    %s416 = scalar_lea.vmem [#allocation2], 25
    %s418 = ssub.s32 2, 1
    %v419 = vpack.c.b16 0, %v412
    %v420 = vpack.c.b8 0, %v419
    %421 = vst [vmem:[%s416] sm:%s418] %v420
    %s422 = scalar_lea.vmem %s0, 26
    %v423 = vld [vmem:[%s422] ss:$0 sm:$0x1]
    %v424 = vunpack.c.0.s8 %v423
    %v425 = vunpack.c.1.s8 %v423
    %v426 = vunpack.c.2.s8 %v423
    %v427 = vunpack.c.3.s8 %v423
    %v428 = vand.u32 %v424, 255
    %v429 = vand.u32 %v425, 255
    %v430 = vand.u32 %v426, 255
    %v431 = vand.u32 %v427, 255
    %s432 = scalar_lea.vmem [#allocation2], 26
    %s434 = ssub.s32 2, 1
    %v435 = vpack.c.b16 0, %v428
    %v436 = vpack.c.b8 0, %v435
    %437 = vst [vmem:[%s432] sm:%s434] %v436
    %s438 = scalar_lea.vmem %s0, 27
    %v439 = vld [vmem:[%s438] ss:$0 sm:$0x1]
    %v440 = vunpack.c.0.s8 %v439
    %v441 = vunpack.c.1.s8 %v439
    %v442 = vunpack.c.2.s8 %v439
    %v443 = vunpack.c.3.s8 %v439
    %v444 = vand.u32 %v440, 255
    %v445 = vand.u32 %v441, 255
    %v446 = vand.u32 %v442, 255
    %v447 = vand.u32 %v443, 255
    %s448 = scalar_lea.vmem [#allocation2], 27
    %s450 = ssub.s32 2, 1
    %v451 = vpack.c.b16 0, %v444
    %v452 = vpack.c.b8 0, %v451
    %453 = vst [vmem:[%s448] sm:%s450] %v452
    %s454 = scalar_lea.vmem %s0, 28
    %v455 = vld [vmem:[%s454] ss:$0 sm:$0x1]
    %v456 = vunpack.c.0.s8 %v455
    %v457 = vunpack.c.1.s8 %v455
    %v458 = vunpack.c.2.s8 %v455
    %v459 = vunpack.c.3.s8 %v455
    %v460 = vand.u32 %v456, 255
    %v461 = vand.u32 %v457, 255
    %v462 = vand.u32 %v458, 255
    %v463 = vand.u32 %v459, 255
    %s464 = scalar_lea.vmem [#allocation2], 28
    %s466 = ssub.s32 2, 1
    %v467 = vpack.c.b16 0, %v460
    %v468 = vpack.c.b8 0, %v467
    %469 = vst [vmem:[%s464] sm:%s466] %v468
    %s470 = scalar_lea.vmem %s0, 29
    %v471 = vld [vmem:[%s470] ss:$0 sm:$0x1]
    %v472 = vunpack.c.0.s8 %v471
    %v473 = vunpack.c.1.s8 %v471
    %v474 = vunpack.c.2.s8 %v471
    %v475 = vunpack.c.3.s8 %v471
    %v476 = vand.u32 %v472, 255
    %v477 = vand.u32 %v473, 255
    %v478 = vand.u32 %v474, 255
    %v479 = vand.u32 %v475, 255
    %s480 = scalar_lea.vmem [#allocation2], 29
    %s482 = ssub.s32 2, 1
    %v483 = vpack.c.b16 0, %v476
    %v484 = vpack.c.b8 0, %v483
    %485 = vst [vmem:[%s480] sm:%s482] %v484
    %s486 = scalar_lea.vmem %s0, 30
    %v487 = vld [vmem:[%s486] ss:$0 sm:$0x1]
    %v488 = vunpack.c.0.s8 %v487
    %v489 = vunpack.c.1.s8 %v487
    %v490 = vunpack.c.2.s8 %v487
    %v491 = vunpack.c.3.s8 %v487
    %v492 = vand.u32 %v488, 255
    %v493 = vand.u32 %v489, 255
    %v494 = vand.u32 %v490, 255
    %v495 = vand.u32 %v491, 255
    %s496 = scalar_lea.vmem [#allocation2], 30
    %s498 = ssub.s32 2, 1
    %v499 = vpack.c.b16 0, %v492
    %v500 = vpack.c.b8 0, %v499
    %501 = vst [vmem:[%s496] sm:%s498] %v500
    %s502 = scalar_lea.vmem %s0, 31
    %v503 = vld [vmem:[%s502] ss:$0 sm:$0x1]
    %v504 = vunpack.c.0.s8 %v503
    %v505 = vunpack.c.1.s8 %v503
    %v506 = vunpack.c.2.s8 %v503
    %v507 = vunpack.c.3.s8 %v503
    %v508 = vand.u32 %v504, 255
    %v509 = vand.u32 %v505, 255
    %v510 = vand.u32 %v506, 255
    %v511 = vand.u32 %v507, 255
    %s512 = scalar_lea.vmem [#allocation2], 31
    %s514 = ssub.s32 2, 1
    %v515 = vpack.c.b16 0, %v508
    %v516 = vpack.c.b8 0, %v515
    %517 = vst [vmem:[%s512] sm:%s514] %v516
    %s518 = scalar_lea.vmem %s0, 32
    %v519 = vld [vmem:[%s518] ss:$0 sm:$0x1]
    %v520 = vunpack.c.0.s8 %v519
    %v521 = vunpack.c.1.s8 %v519
    %v522 = vunpack.c.2.s8 %v519
    %v523 = vunpack.c.3.s8 %v519
    %v524 = vand.u32 %v520, 255
    %v525 = vand.u32 %v521, 255
    %v526 = vand.u32 %v522, 255
    %v527 = vand.u32 %v523, 255
    %s528 = scalar_lea.vmem [#allocation2], 32
    %s530 = ssub.s32 2, 1
    %v531 = vpack.c.b16 0, %v524
    %v532 = vpack.c.b8 0, %v531
    %533 = vst [vmem:[%s528] sm:%s530] %v532
    %s534 = scalar_lea.vmem %s0, 33
    %v535 = vld [vmem:[%s534] ss:$0 sm:$0x1]
    %v536 = vunpack.c.0.s8 %v535
    %v537 = vunpack.c.1.s8 %v535
    %v538 = vunpack.c.2.s8 %v535
    %v539 = vunpack.c.3.s8 %v535
    %v540 = vand.u32 %v536, 255
    %v541 = vand.u32 %v537, 255
    %v542 = vand.u32 %v538, 255
    %v543 = vand.u32 %v539, 255
    %s544 = scalar_lea.vmem [#allocation2], 33
    %s546 = ssub.s32 2, 1
    %v547 = vpack.c.b16 0, %v540
    %v548 = vpack.c.b8 0, %v547
    %549 = vst [vmem:[%s544] sm:%s546] %v548
    %s550 = scalar_lea.vmem %s0, 34
    %v551 = vld [vmem:[%s550] ss:$0 sm:$0x1]
    %v552 = vunpack.c.0.s8 %v551
    %v553 = vunpack.c.1.s8 %v551
    %v554 = vunpack.c.2.s8 %v551
    %v555 = vunpack.c.3.s8 %v551
    %v556 = vand.u32 %v552, 255
    %v557 = vand.u32 %v553, 255
    %v558 = vand.u32 %v554, 255
    %v559 = vand.u32 %v555, 255
    %s560 = scalar_lea.vmem [#allocation2], 34
    %s562 = ssub.s32 2, 1
    %v563 = vpack.c.b16 0, %v556
    %v564 = vpack.c.b8 0, %v563
    %565 = vst [vmem:[%s560] sm:%s562] %v564
    %s566 = scalar_lea.vmem %s0, 35
    %v567 = vld [vmem:[%s566] ss:$0 sm:$0x1]
    %v568 = vunpack.c.0.s8 %v567
    %v569 = vunpack.c.1.s8 %v567
    %v570 = vunpack.c.2.s8 %v567
    %v571 = vunpack.c.3.s8 %v567
    %v572 = vand.u32 %v568, 255
    %v573 = vand.u32 %v569, 255
    %v574 = vand.u32 %v570, 255
    %v575 = vand.u32 %v571, 255
    %s576 = scalar_lea.vmem [#allocation2], 35
    %s578 = ssub.s32 2, 1
    %v579 = vpack.c.b16 0, %v572
    %v580 = vpack.c.b8 0, %v579
    %581 = vst [vmem:[%s576] sm:%s578] %v580
    %s582 = scalar_lea.vmem %s0, 36
    %v583 = vld [vmem:[%s582] ss:$0 sm:$0x1]
    %v584 = vunpack.c.0.s8 %v583
    %v585 = vunpack.c.1.s8 %v583
    %v586 = vunpack.c.2.s8 %v583
    %v587 = vunpack.c.3.s8 %v583
    %v588 = vand.u32 %v584, 255
    %v589 = vand.u32 %v585, 255
    %v590 = vand.u32 %v586, 255
    %v591 = vand.u32 %v587, 255
    %s592 = scalar_lea.vmem [#allocation2], 36
    %s594 = ssub.s32 2, 1
    %v595 = vpack.c.b16 0, %v588
    %v596 = vpack.c.b8 0, %v595
    %597 = vst [vmem:[%s592] sm:%s594] %v596
    %s598 = scalar_lea.vmem %s0, 37
    %v599 = vld [vmem:[%s598] ss:$0 sm:$0x1]
    %v600 = vunpack.c.0.s8 %v599
    %v601 = vunpack.c.1.s8 %v599
    %v602 = vunpack.c.2.s8 %v599
    %v603 = vunpack.c.3.s8 %v599
    %v604 = vand.u32 %v600, 255
    %v605 = vand.u32 %v601, 255
    %v606 = vand.u32 %v602, 255
    %v607 = vand.u32 %v603, 255
    %s608 = scalar_lea.vmem [#allocation2], 37
    %s610 = ssub.s32 2, 1
    %v611 = vpack.c.b16 0, %v604
    %v612 = vpack.c.b8 0, %v611
    %613 = vst [vmem:[%s608] sm:%s610] %v612
    %s614 = scalar_lea.vmem %s0, 38
    %v615 = vld [vmem:[%s614] ss:$0 sm:$0x1]
    %v616 = vunpack.c.0.s8 %v615
    %v617 = vunpack.c.1.s8 %v615
    %v618 = vunpack.c.2.s8 %v615
    %v619 = vunpack.c.3.s8 %v615
    %v620 = vand.u32 %v616, 255
    %v621 = vand.u32 %v617, 255
    %v622 = vand.u32 %v618, 255
    %v623 = vand.u32 %v619, 255
    %s624 = scalar_lea.vmem [#allocation2], 38
    %s626 = ssub.s32 2, 1
    %v627 = vpack.c.b16 0, %v620
    %v628 = vpack.c.b8 0, %v627
    %629 = vst [vmem:[%s624] sm:%s626] %v628
    %s630 = scalar_lea.vmem %s0, 39
    %v631 = vld [vmem:[%s630] ss:$0 sm:$0x1]
    %v632 = vunpack.c.0.s8 %v631
    %v633 = vunpack.c.1.s8 %v631
    %v634 = vunpack.c.2.s8 %v631
    %v635 = vunpack.c.3.s8 %v631
    %v636 = vand.u32 %v632, 255
    %v637 = vand.u32 %v633, 255
    %v638 = vand.u32 %v634, 255
    %v639 = vand.u32 %v635, 255
    %s640 = scalar_lea.vmem [#allocation2], 39
    %s642 = ssub.s32 2, 1
    %v643 = vpack.c.b16 0, %v636
    %v644 = vpack.c.b8 0, %v643
    %645 = vst [vmem:[%s640] sm:%s642] %v644
    %s646 = scalar_lea.vmem %s0, 40
    %v647 = vld [vmem:[%s646] ss:$0 sm:$0x1]
    %v648 = vunpack.c.0.s8 %v647
    %v649 = vunpack.c.1.s8 %v647
    %v650 = vunpack.c.2.s8 %v647
    %v651 = vunpack.c.3.s8 %v647
    %v652 = vand.u32 %v648, 255
    %v653 = vand.u32 %v649, 255
    %v654 = vand.u32 %v650, 255
    %v655 = vand.u32 %v651, 255
    %s656 = scalar_lea.vmem [#allocation2], 40
    %s658 = ssub.s32 2, 1
    %v659 = vpack.c.b16 0, %v652
    %v660 = vpack.c.b8 0, %v659
    %661 = vst [vmem:[%s656] sm:%s658] %v660
    %s662 = scalar_lea.vmem %s0, 41
    %v663 = vld [vmem:[%s662] ss:$0 sm:$0x1]
    %v664 = vunpack.c.0.s8 %v663
    %v665 = vunpack.c.1.s8 %v663
    %v666 = vunpack.c.2.s8 %v663
    %v667 = vunpack.c.3.s8 %v663
    %v668 = vand.u32 %v664, 255
    %v669 = vand.u32 %v665, 255
    %v670 = vand.u32 %v666, 255
    %v671 = vand.u32 %v667, 255
    %s672 = scalar_lea.vmem [#allocation2], 41
    %s674 = ssub.s32 2, 1
    %v675 = vpack.c.b16 0, %v668
    %v676 = vpack.c.b8 0, %v675
    %677 = vst [vmem:[%s672] sm:%s674] %v676
    %s678 = scalar_lea.vmem %s0, 42
    %v679 = vld [vmem:[%s678] ss:$0 sm:$0x1]
    %v680 = vunpack.c.0.s8 %v679
    %v681 = vunpack.c.1.s8 %v679
    %v682 = vunpack.c.2.s8 %v679
    %v683 = vunpack.c.3.s8 %v679
    %v684 = vand.u32 %v680, 255
    %v685 = vand.u32 %v681, 255
    %v686 = vand.u32 %v682, 255
    %v687 = vand.u32 %v683, 255
    %s688 = scalar_lea.vmem [#allocation2], 42
    %s690 = ssub.s32 2, 1
    %v691 = vpack.c.b16 0, %v684
    %v692 = vpack.c.b8 0, %v691
    %693 = vst [vmem:[%s688] sm:%s690] %v692
    %s694 = scalar_lea.vmem %s0, 43
    %v695 = vld [vmem:[%s694] ss:$0 sm:$0x1]
    %v696 = vunpack.c.0.s8 %v695
    %v697 = vunpack.c.1.s8 %v695
    %v698 = vunpack.c.2.s8 %v695
    %v699 = vunpack.c.3.s8 %v695
    %v700 = vand.u32 %v696, 255
    %v701 = vand.u32 %v697, 255
    %v702 = vand.u32 %v698, 255
    %v703 = vand.u32 %v699, 255
    %s704 = scalar_lea.vmem [#allocation2], 43
    %s706 = ssub.s32 2, 1
    %v707 = vpack.c.b16 0, %v700
    %v708 = vpack.c.b8 0, %v707
    %709 = vst [vmem:[%s704] sm:%s706] %v708
    %s710 = scalar_lea.vmem %s0, 44
    %v711 = vld [vmem:[%s710] ss:$0 sm:$0x1]
    %v712 = vunpack.c.0.s8 %v711
    %v713 = vunpack.c.1.s8 %v711
    %v714 = vunpack.c.2.s8 %v711
    %v715 = vunpack.c.3.s8 %v711
    %v716 = vand.u32 %v712, 255
    %v717 = vand.u32 %v713, 255
    %v718 = vand.u32 %v714, 255
    %v719 = vand.u32 %v715, 255
    %s720 = scalar_lea.vmem [#allocation2], 44
    %s722 = ssub.s32 2, 1
    %v723 = vpack.c.b16 0, %v716
    %v724 = vpack.c.b8 0, %v723
    %725 = vst [vmem:[%s720] sm:%s722] %v724
    %s726 = scalar_lea.vmem %s0, 45
    %v727 = vld [vmem:[%s726] ss:$0 sm:$0x1]
    %v728 = vunpack.c.0.s8 %v727
    %v729 = vunpack.c.1.s8 %v727
    %v730 = vunpack.c.2.s8 %v727
    %v731 = vunpack.c.3.s8 %v727
    %v732 = vand.u32 %v728, 255
    %v733 = vand.u32 %v729, 255
    %v734 = vand.u32 %v730, 255
    %v735 = vand.u32 %v731, 255
    %s736 = scalar_lea.vmem [#allocation2], 45
    %s738 = ssub.s32 2, 1
    %v739 = vpack.c.b16 0, %v732
    %v740 = vpack.c.b8 0, %v739
    %741 = vst [vmem:[%s736] sm:%s738] %v740
    %s742 = scalar_lea.vmem %s0, 46
    %v743 = vld [vmem:[%s742] ss:$0 sm:$0x1]
    %v744 = vunpack.c.0.s8 %v743
    %v745 = vunpack.c.1.s8 %v743
    %v746 = vunpack.c.2.s8 %v743
    %v747 = vunpack.c.3.s8 %v743
    %v748 = vand.u32 %v744, 255
    %v749 = vand.u32 %v745, 255
    %v750 = vand.u32 %v746, 255
    %v751 = vand.u32 %v747, 255
    %s752 = scalar_lea.vmem [#allocation2], 46
    %s754 = ssub.s32 2, 1
    %v755 = vpack.c.b16 0, %v748
    %v756 = vpack.c.b8 0, %v755
    %757 = vst [vmem:[%s752] sm:%s754] %v756
    %s758 = scalar_lea.vmem %s0, 47
    %v759 = vld [vmem:[%s758] ss:$0 sm:$0x1]
    %v760 = vunpack.c.0.s8 %v759
    %v761 = vunpack.c.1.s8 %v759
    %v762 = vunpack.c.2.s8 %v759
    %v763 = vunpack.c.3.s8 %v759
    %v764 = vand.u32 %v760, 255
    %v765 = vand.u32 %v761, 255
    %v766 = vand.u32 %v762, 255
    %v767 = vand.u32 %v763, 255
    %s768 = scalar_lea.vmem [#allocation2], 47
    %s770 = ssub.s32 2, 1
    %v771 = vpack.c.b16 0, %v764
    %v772 = vpack.c.b8 0, %v771
    %773 = vst [vmem:[%s768] sm:%s770] %v772
    %s774 = scalar_lea.vmem %s0, 48
    %v775 = vld [vmem:[%s774] ss:$0 sm:$0x1]
    %v776 = vunpack.c.0.s8 %v775
    %v777 = vunpack.c.1.s8 %v775
    %v778 = vunpack.c.2.s8 %v775
    %v779 = vunpack.c.3.s8 %v775
    %v780 = vand.u32 %v776, 255
    %v781 = vand.u32 %v777, 255
    %v782 = vand.u32 %v778, 255
    %v783 = vand.u32 %v779, 255
    %s784 = scalar_lea.vmem [#allocation2], 48
    %s786 = ssub.s32 2, 1
    %v787 = vpack.c.b16 0, %v780
    %v788 = vpack.c.b8 0, %v787
    %789 = vst [vmem:[%s784] sm:%s786] %v788
    %s790 = scalar_lea.vmem %s0, 49
    %v791 = vld [vmem:[%s790] ss:$0 sm:$0x1]
    %v792 = vunpack.c.0.s8 %v791
    %v793 = vunpack.c.1.s8 %v791
    %v794 = vunpack.c.2.s8 %v791
    %v795 = vunpack.c.3.s8 %v791
    %v796 = vand.u32 %v792, 255
    %v797 = vand.u32 %v793, 255
    %v798 = vand.u32 %v794, 255
    %v799 = vand.u32 %v795, 255
    %s800 = scalar_lea.vmem [#allocation2], 49
    %s802 = ssub.s32 2, 1
    %v803 = vpack.c.b16 0, %v796
    %v804 = vpack.c.b8 0, %v803
    %805 = vst [vmem:[%s800] sm:%s802] %v804
    %s806 = scalar_lea.vmem %s0, 50
    %v807 = vld [vmem:[%s806] ss:$0 sm:$0x1]
    %v808 = vunpack.c.0.s8 %v807
    %v809 = vunpack.c.1.s8 %v807
    %v810 = vunpack.c.2.s8 %v807
    %v811 = vunpack.c.3.s8 %v807
    %v812 = vand.u32 %v808, 255
    %v813 = vand.u32 %v809, 255
    %v814 = vand.u32 %v810, 255
    %v815 = vand.u32 %v811, 255
    %s816 = scalar_lea.vmem [#allocation2], 50
    %s818 = ssub.s32 2, 1
    %v819 = vpack.c.b16 0, %v812
    %v820 = vpack.c.b8 0, %v819
    %821 = vst [vmem:[%s816] sm:%s818] %v820
    %s822 = scalar_lea.vmem %s0, 51
    %v823 = vld [vmem:[%s822] ss:$0 sm:$0x1]
    %v824 = vunpack.c.0.s8 %v823
    %v825 = vunpack.c.1.s8 %v823
    %v826 = vunpack.c.2.s8 %v823
    %v827 = vunpack.c.3.s8 %v823
    %v828 = vand.u32 %v824, 255
    %v829 = vand.u32 %v825, 255
    %v830 = vand.u32 %v826, 255
    %v831 = vand.u32 %v827, 255
    %s832 = scalar_lea.vmem [#allocation2], 51
    %s834 = ssub.s32 2, 1
    %v835 = vpack.c.b16 0, %v828
    %v836 = vpack.c.b8 0, %v835
    %837 = vst [vmem:[%s832] sm:%s834] %v836
    %s838 = scalar_lea.vmem %s0, 52
    %v839 = vld [vmem:[%s838] ss:$0 sm:$0x1]
    %v840 = vunpack.c.0.s8 %v839
    %v841 = vunpack.c.1.s8 %v839
    %v842 = vunpack.c.2.s8 %v839
    %v843 = vunpack.c.3.s8 %v839
    %v844 = vand.u32 %v840, 255
    %v845 = vand.u32 %v841, 255
    %v846 = vand.u32 %v842, 255
    %v847 = vand.u32 %v843, 255
    %s848 = scalar_lea.vmem [#allocation2], 52
    %s850 = ssub.s32 2, 1
    %v851 = vpack.c.b16 0, %v844
    %v852 = vpack.c.b8 0, %v851
    %853 = vst [vmem:[%s848] sm:%s850] %v852
    %s854 = scalar_lea.vmem %s0, 53
    %v855 = vld [vmem:[%s854] ss:$0 sm:$0x1]
    %v856 = vunpack.c.0.s8 %v855
    %v857 = vunpack.c.1.s8 %v855
    %v858 = vunpack.c.2.s8 %v855
    %v859 = vunpack.c.3.s8 %v855
    %v860 = vand.u32 %v856, 255
    %v861 = vand.u32 %v857, 255
    %v862 = vand.u32 %v858, 255
    %v863 = vand.u32 %v859, 255
    %s864 = scalar_lea.vmem [#allocation2], 53
    %s866 = ssub.s32 2, 1
    %v867 = vpack.c.b16 0, %v860
    %v868 = vpack.c.b8 0, %v867
    %869 = vst [vmem:[%s864] sm:%s866] %v868
    %s870 = scalar_lea.vmem %s0, 54
    %v871 = vld [vmem:[%s870] ss:$0 sm:$0x1]
    %v872 = vunpack.c.0.s8 %v871
    %v873 = vunpack.c.1.s8 %v871
    %v874 = vunpack.c.2.s8 %v871
    %v875 = vunpack.c.3.s8 %v871
    %v876 = vand.u32 %v872, 255
    %v877 = vand.u32 %v873, 255
    %v878 = vand.u32 %v874, 255
    %v879 = vand.u32 %v875, 255
    %s880 = scalar_lea.vmem [#allocation2], 54
    %s882 = ssub.s32 2, 1
    %v883 = vpack.c.b16 0, %v876
    %v884 = vpack.c.b8 0, %v883
    %885 = vst [vmem:[%s880] sm:%s882] %v884
    %s886 = scalar_lea.vmem %s0, 55
    %v887 = vld [vmem:[%s886] ss:$0 sm:$0x1]
    %v888 = vunpack.c.0.s8 %v887
    %v889 = vunpack.c.1.s8 %v887
    %v890 = vunpack.c.2.s8 %v887
    %v891 = vunpack.c.3.s8 %v887
    %v892 = vand.u32 %v888, 255
    %v893 = vand.u32 %v889, 255
    %v894 = vand.u32 %v890, 255
    %v895 = vand.u32 %v891, 255
    %s896 = scalar_lea.vmem [#allocation2], 55
    %s898 = ssub.s32 2, 1
    %v899 = vpack.c.b16 0, %v892
    %v900 = vpack.c.b8 0, %v899
    %901 = vst [vmem:[%s896] sm:%s898] %v900
    %s902 = scalar_lea.vmem %s0, 56
    %v903 = vld [vmem:[%s902] ss:$0 sm:$0x1]
    %v904 = vunpack.c.0.s8 %v903
    %v905 = vunpack.c.1.s8 %v903
    %v906 = vunpack.c.2.s8 %v903
    %v907 = vunpack.c.3.s8 %v903
    %v908 = vand.u32 %v904, 255
    %v909 = vand.u32 %v905, 255
    %v910 = vand.u32 %v906, 255
    %v911 = vand.u32 %v907, 255
    %s912 = scalar_lea.vmem [#allocation2], 56
    %s914 = ssub.s32 2, 1
    %v915 = vpack.c.b16 0, %v908
    %v916 = vpack.c.b8 0, %v915
    %917 = vst [vmem:[%s912] sm:%s914] %v916
    %s918 = scalar_lea.vmem %s0, 57
    %v919 = vld [vmem:[%s918] ss:$0 sm:$0x1]
    %v920 = vunpack.c.0.s8 %v919
    %v921 = vunpack.c.1.s8 %v919
    %v922 = vunpack.c.2.s8 %v919
    %v923 = vunpack.c.3.s8 %v919
    %v924 = vand.u32 %v920, 255
    %v925 = vand.u32 %v921, 255
    %v926 = vand.u32 %v922, 255
    %v927 = vand.u32 %v923, 255
    %s928 = scalar_lea.vmem [#allocation2], 57
    %s930 = ssub.s32 2, 1
    %v931 = vpack.c.b16 0, %v924
    %v932 = vpack.c.b8 0, %v931
    %933 = vst [vmem:[%s928] sm:%s930] %v932
    %s934 = scalar_lea.vmem %s0, 58
    %v935 = vld [vmem:[%s934] ss:$0 sm:$0x1]
    %v936 = vunpack.c.0.s8 %v935
    %v937 = vunpack.c.1.s8 %v935
    %v938 = vunpack.c.2.s8 %v935
    %v939 = vunpack.c.3.s8 %v935
    %v940 = vand.u32 %v936, 255
    %v941 = vand.u32 %v937, 255
    %v942 = vand.u32 %v938, 255
    %v943 = vand.u32 %v939, 255
    %s944 = scalar_lea.vmem [#allocation2], 58
    %s946 = ssub.s32 2, 1
    %v947 = vpack.c.b16 0, %v940
    %v948 = vpack.c.b8 0, %v947
    %949 = vst [vmem:[%s944] sm:%s946] %v948
    %s950 = scalar_lea.vmem %s0, 59
    %v951 = vld [vmem:[%s950] ss:$0 sm:$0x1]
    %v952 = vunpack.c.0.s8 %v951
    %v953 = vunpack.c.1.s8 %v951
    %v954 = vunpack.c.2.s8 %v951
    %v955 = vunpack.c.3.s8 %v951
    %v956 = vand.u32 %v952, 255
    %v957 = vand.u32 %v953, 255
    %v958 = vand.u32 %v954, 255
    %v959 = vand.u32 %v955, 255
    %s960 = scalar_lea.vmem [#allocation2], 59
    %s962 = ssub.s32 2, 1
    %v963 = vpack.c.b16 0, %v956
    %v964 = vpack.c.b8 0, %v963
    %965 = vst [vmem:[%s960] sm:%s962] %v964
    %s966 = scalar_lea.vmem %s0, 60
    %v967 = vld [vmem:[%s966] ss:$0 sm:$0x1]
    %v968 = vunpack.c.0.s8 %v967
    %v969 = vunpack.c.1.s8 %v967
    %v970 = vunpack.c.2.s8 %v967
    %v971 = vunpack.c.3.s8 %v967
    %v972 = vand.u32 %v968, 255
    %v973 = vand.u32 %v969, 255
    %v974 = vand.u32 %v970, 255
    %v975 = vand.u32 %v971, 255
    %s976 = scalar_lea.vmem [#allocation2], 60
    %s978 = ssub.s32 2, 1
    %v979 = vpack.c.b16 0, %v972
    %v980 = vpack.c.b8 0, %v979
    %981 = vst [vmem:[%s976] sm:%s978] %v980
    %s982 = scalar_lea.vmem %s0, 61
    %v983 = vld [vmem:[%s982] ss:$0 sm:$0x1]
    %v984 = vunpack.c.0.s8 %v983
    %v985 = vunpack.c.1.s8 %v983
    %v986 = vunpack.c.2.s8 %v983
    %v987 = vunpack.c.3.s8 %v983
    %v988 = vand.u32 %v984, 255
    %v989 = vand.u32 %v985, 255
    %v990 = vand.u32 %v986, 255
    %v991 = vand.u32 %v987, 255
    %s992 = scalar_lea.vmem [#allocation2], 61
    %s994 = ssub.s32 2, 1
    %v995 = vpack.c.b16 0, %v988
    %v996 = vpack.c.b8 0, %v995
    %997 = vst [vmem:[%s992] sm:%s994] %v996
    %s998 = scalar_lea.vmem %s0, 62
    %v999 = vld [vmem:[%s998] ss:$0 sm:$0x1]
    %v1000 = vunpack.c.0.s8 %v999
    %v1001 = vunpack.c.1.s8 %v999
    %v1002 = vunpack.c.2.s8 %v999
    %v1003 = vunpack.c.3.s8 %v999
    %v1004 = vand.u32 %v1000, 255
    %v1005 = vand.u32 %v1001, 255
    %v1006 = vand.u32 %v1002, 255
    %v1007 = vand.u32 %v1003, 255
    %s1008 = scalar_lea.vmem [#allocation2], 62
    %s1010 = ssub.s32 2, 1
    %v1011 = vpack.c.b16 0, %v1004
    %v1012 = vpack.c.b8 0, %v1011
    %1013 = vst [vmem:[%s1008] sm:%s1010] %v1012
    %s1014 = scalar_lea.vmem %s0, 63
    %v1015 = vld [vmem:[%s1014] ss:$0 sm:$0x1]
    %v1016 = vunpack.c.0.s8 %v1015
    %v1017 = vunpack.c.1.s8 %v1015
    %v1018 = vunpack.c.2.s8 %v1015
    %v1019 = vunpack.c.3.s8 %v1015
    %v1020 = vand.u32 %v1016, 255
    %v1021 = vand.u32 %v1017, 255
    %v1022 = vand.u32 %v1018, 255
    %v1023 = vand.u32 %v1019, 255
    %s1024 = scalar_lea.vmem [#allocation2], 63
    %s1026 = ssub.s32 2, 1
    %v1027 = vpack.c.b16 0, %v1020
    %v1028 = vpack.c.b8 0, %v1027
    %1029 = vst [vmem:[%s1024] sm:%s1026] %v1028
    %v1030 = vld [vmem:[#allocation2] sm:$0xff]
    %v1031 = vld [vmem:[#allocation2 + $0x8] sm:$0xff]
    %v1032 = vld [vmem:[#allocation2 + $0x10] sm:$0xff]
    %v1033 = vld [vmem:[#allocation2 + $0x18] sm:$0xff]
    %v1034 = vld [vmem:[#allocation2 + $0x20] sm:$0xff]
    %v1035 = vld [vmem:[#allocation2 + $0x28] sm:$0xff]
    %v1036 = vld [vmem:[#allocation2 + $0x30] sm:$0xff]
    %v1037 = vld [vmem:[#allocation2 + $0x38] sm:$0xff]
    %v1038 = vunpack.c.0.s8 %v1030
    %v1039 = vunpack.c.1.s8 %v1030
    %v1040 = vunpack.c.2.s8 %v1030
    %v1041 = vunpack.c.3.s8 %v1030
    %v1042 = vunpack.c.0.s8 %v1031
    %v1043 = vunpack.c.1.s8 %v1031
    %v1044 = vunpack.c.2.s8 %v1031
    %v1045 = vunpack.c.3.s8 %v1031
    %v1046 = vunpack.c.0.s8 %v1032
    %v1047 = vunpack.c.1.s8 %v1032
    %v1048 = vunpack.c.2.s8 %v1032
    %v1049 = vunpack.c.3.s8 %v1032
    %v1050 = vunpack.c.0.s8 %v1033
    %v1051 = vunpack.c.1.s8 %v1033
    %v1052 = vunpack.c.2.s8 %v1033
    %v1053 = vunpack.c.3.s8 %v1033
    %v1054 = vunpack.c.0.s8 %v1034
    %v1055 = vunpack.c.1.s8 %v1034
    %v1056 = vunpack.c.2.s8 %v1034
    %v1057 = vunpack.c.3.s8 %v1034
    %v1058 = vunpack.c.0.s8 %v1035
    %v1059 = vunpack.c.1.s8 %v1035
    %v1060 = vunpack.c.2.s8 %v1035
    %v1061 = vunpack.c.3.s8 %v1035
    %v1062 = vunpack.c.0.s8 %v1036
    %v1063 = vunpack.c.1.s8 %v1036
    %v1064 = vunpack.c.2.s8 %v1036
    %v1065 = vunpack.c.3.s8 %v1036
    %v1066 = vunpack.c.0.s8 %v1037
    %v1067 = vunpack.c.1.s8 %v1037
    %v1068 = vunpack.c.2.s8 %v1037
    %v1069 = vunpack.c.3.s8 %v1037
    %v1070 = vand.u32 %v1038, 255
    %v1071 = vand.u32 %v1039, 255
    %v1072 = vand.u32 %v1040, 255
    %v1073 = vand.u32 %v1041, 255
    %v1074 = vand.u32 %v1042, 255
    %v1075 = vand.u32 %v1043, 255
    %v1076 = vand.u32 %v1044, 255
    %v1077 = vand.u32 %v1045, 255
    %v1078 = vand.u32 %v1046, 255
    %v1079 = vand.u32 %v1047, 255
    %v1080 = vand.u32 %v1048, 255
    %v1081 = vand.u32 %v1049, 255
    %v1082 = vand.u32 %v1050, 255
    %v1083 = vand.u32 %v1051, 255
    %v1084 = vand.u32 %v1052, 255
    %v1085 = vand.u32 %v1053, 255
    %v1086 = vand.u32 %v1054, 255
    %v1087 = vand.u32 %v1055, 255
    %v1088 = vand.u32 %v1056, 255
    %v1089 = vand.u32 %v1057, 255
    %v1090 = vand.u32 %v1058, 255
    %v1091 = vand.u32 %v1059, 255
    %v1092 = vand.u32 %v1060, 255
    %v1093 = vand.u32 %v1061, 255
    %v1094 = vand.u32 %v1062, 255
    %v1095 = vand.u32 %v1063, 255
    %v1096 = vand.u32 %v1064, 255
    %v1097 = vand.u32 %v1065, 255
    %v1098 = vand.u32 %v1066, 255
    %v1099 = vand.u32 %v1067, 255
    %v1100 = vand.u32 %v1068, 255
    %v1101 = vand.u32 %v1069, 255
    %v1102 = vcvt.s32.f32 %v1070
    %v1103 = vcvt.s32.f32 %v1071
    %v1104 = vcvt.s32.f32 %v1072
    %v1105 = vcvt.s32.f32 %v1073
    %v1106 = vcvt.s32.f32 %v1074
    %v1107 = vcvt.s32.f32 %v1075
    %v1108 = vcvt.s32.f32 %v1076
    %v1109 = vcvt.s32.f32 %v1077
    %v1110 = vcvt.s32.f32 %v1078
    %v1111 = vcvt.s32.f32 %v1079
    %v1112 = vcvt.s32.f32 %v1080
    %v1113 = vcvt.s32.f32 %v1081
    %v1114 = vcvt.s32.f32 %v1082
    %v1115 = vcvt.s32.f32 %v1083
    %v1116 = vcvt.s32.f32 %v1084
    %v1117 = vcvt.s32.f32 %v1085
    %v1118 = vcvt.s32.f32 %v1086
    %v1119 = vcvt.s32.f32 %v1087
    %v1120 = vcvt.s32.f32 %v1088
    %v1121 = vcvt.s32.f32 %v1089
    %v1122 = vcvt.s32.f32 %v1090
    %v1123 = vcvt.s32.f32 %v1091
    %v1124 = vcvt.s32.f32 %v1092
    %v1125 = vcvt.s32.f32 %v1093
    %v1126 = vcvt.s32.f32 %v1094
    %v1127 = vcvt.s32.f32 %v1095
    %v1128 = vcvt.s32.f32 %v1096
    %v1129 = vcvt.s32.f32 %v1097
    %v1130 = vcvt.s32.f32 %v1098
    %v1131 = vcvt.s32.f32 %v1099
    %v1132 = vcvt.s32.f32 %v1100
    %v1133 = vcvt.s32.f32 %v1101
    %v1134 = vmul.f32 %v1102, 0.003921569
    %v1135 = vmul.f32 %v1103, 0.003921569
    %v1136 = vmul.f32 %v1104, 0.003921569
    %v1137 = vmul.f32 %v1105, 0.003921569
    %v1138 = vmul.f32 %v1106, 0.003921569
    %v1139 = vmul.f32 %v1107, 0.003921569
    %v1140 = vmul.f32 %v1108, 0.003921569
    %v1141 = vmul.f32 %v1109, 0.003921569
    %v1142 = vmul.f32 %v1110, 0.003921569
    %v1143 = vmul.f32 %v1111, 0.003921569
    %v1144 = vmul.f32 %v1112, 0.003921569
    %v1145 = vmul.f32 %v1113, 0.003921569
    %v1146 = vmul.f32 %v1114, 0.003921569
    %v1147 = vmul.f32 %v1115, 0.003921569
    %v1148 = vmul.f32 %v1116, 0.003921569
    %v1149 = vmul.f32 %v1117, 0.003921569
    %v1150 = vmul.f32 %v1118, 0.003921569
    %v1151 = vmul.f32 %v1119, 0.003921569
    %v1152 = vmul.f32 %v1120, 0.003921569
    %v1153 = vmul.f32 %v1121, 0.003921569
    %v1154 = vmul.f32 %v1122, 0.003921569
    %v1155 = vmul.f32 %v1123, 0.003921569
    %v1156 = vmul.f32 %v1124, 0.003921569
    %v1157 = vmul.f32 %v1125, 0.003921569
    %v1158 = vmul.f32 %v1126, 0.003921569
    %v1159 = vmul.f32 %v1127, 0.003921569
    %v1160 = vmul.f32 %v1128, 0.003921569
    %v1161 = vmul.f32 %v1129, 0.003921569
    %v1162 = vmul.f32 %v1130, 0.003921569
    %v1163 = vmul.f32 %v1131, 0.003921569
    %v1164 = vmul.f32 %v1132, 0.003921569
    %v1165 = vmul.f32 %v1133, 0.003921569
    %1166 = vst [vmem:[%s1] sm:$0x77] %v1134
    %1167 = vst [vmem:[%s1 + $0x8] sm:$0x77] %v1135
    %1168 = vst [vmem:[%s1 + $0x10] sm:$0x77] %v1136
    %1169 = vst [vmem:[%s1 + $0x18] sm:$0x77] %v1137
    %1170 = vst [vmem:[%s1 + $0x20] sm:$0x77] %v1138
    %1171 = vst [vmem:[%s1 + $0x28] sm:$0x77] %v1139
    %1172 = vst [vmem:[%s1 + $0x30] sm:$0x77] %v1140
    %1173 = vst [vmem:[%s1 + $0x38] sm:$0x77] %v1141
    %1174 = vst [vmem:[%s1 + $0x40] sm:$0x77] %v1142
    %1175 = vst [vmem:[%s1 + $0x48] sm:$0x77] %v1143
    %1176 = vst [vmem:[%s1 + $0x50] sm:$0x77] %v1144
    %1177 = vst [vmem:[%s1 + $0x58] sm:$0x77] %v1145
    %1178 = vst [vmem:[%s1 + $0x60] sm:$0x77] %v1146
    %1179 = vst [vmem:[%s1 + $0x68] sm:$0x77] %v1147
    %1180 = vst [vmem:[%s1 + $0x70] sm:$0x77] %v1148
    %1181 = vst [vmem:[%s1 + $0x78] sm:$0x77] %v1149
    %1182 = vst [vmem:[%s1 + $0x80] sm:$0x77] %v1150
    %1183 = vst [vmem:[%s1 + $0x88] sm:$0x77] %v1151
    %1184 = vst [vmem:[%s1 + $0x90] sm:$0x77] %v1152
    %1185 = vst [vmem:[%s1 + $0x98] sm:$0x77] %v1153
    %1186 = vst [vmem:[%s1 + $0xa0] sm:$0x77] %v1154
    %1187 = vst [vmem:[%s1 + $0xa8] sm:$0x77] %v1155
    %1188 = vst [vmem:[%s1 + $0xb0] sm:$0x77] %v1156
    %1189 = vst [vmem:[%s1 + $0xb8] sm:$0x77] %v1157
    %1190 = vst [vmem:[%s1 + $0xc0] sm:$0x77] %v1158
    %1191 = vst [vmem:[%s1 + $0xc8] sm:$0x77] %v1159
    %1192 = vst [vmem:[%s1 + $0xd0] sm:$0x77] %v1160
    %1193 = vst [vmem:[%s1 + $0xd8] sm:$0x77] %v1161
    %1194 = vst [vmem:[%s1 + $0xe0] sm:$0x77] %v1162
    %1195 = vst [vmem:[%s1 + $0xe8] sm:$0x77] %v1163
    %1196 = vst [vmem:[%s1 + $0xf0] sm:$0x77] %v1164
    %1197 = vst [vmem:[%s1 + $0xf8] sm:$0x77] %v1165
    // Predicated region
    $region6: #{processor_forward.2} parent=1 // pred_check
      _
    $region7: #{processor_forward.2} parent=1 // pred_check_branch
      %1199 = sbr.rel (0) target = $region9
    $region8: #{processor_forward.2} parent=1 // pred_region
      _
    $region9: #{processor_forward.2} parent=1 // pred_fallthru
      _
    // Predicated region
    $region10: #{processor_forward.2} parent=1 // pred_check
      _
    $region11: #{processor_forward.2} parent=1 // pred_check_branch
      %1201 = sbr.rel (0) target = $region13
    $region12: #{processor_forward.2} parent=1 // pred_region
      _
    $region13: #{processor_forward.2} parent=1 // pred_fallthru
      _

</llo_original>
